<compile_context>
chip_gen: v7x
topology: tpu7x:2x2x1
jax: 0.10.0
libtpu: 0.0.40
codegen_flags: <defaults>
</compile_context>

<pallas_src>
import functools

import jax
import jax.numpy as jnp
from jax.experimental import pallas as pl
from jax.experimental.pallas import tpu as pltpu

_BF16 = jnp.bfloat16
_LN_EPS = 1e-5


def _layernorm(x, gamma, beta, eps=_LN_EPS):
    mu = jnp.mean(x, axis=-1, keepdims=True)
    var = jnp.mean((x - mu) ** 2, axis=-1, keepdims=True)
    return (x - mu) * jax.lax.rsqrt(var + eps) * gamma + beta


def _gelu_exact(x):
    # nn.GELU() default = exact erf formulation (kept in f32 for parity).
    return 0.5 * x * (1.0 + jax.lax.erf(x * 0.7071067811865476))


def _vmem_limit_bytes():
    """Generation-aware VMEM budget: never request the full physical capacity."""
    cap = 128 << 20
    try:
        info = pltpu.get_tpu_info()
        cap = int(getattr(info, "vmem_capacity_bytes", cap) or cap)
    except Exception:
        pass
    # ~25% headroom for compiler-internal scratch / pipeline slack:
    #   v5e/v6e (128 MiB) -> 96 MiB; v7x (64 MiB) -> 48 MiB.
    return min(cap * 3 // 4, 96 << 20)


def _const_spec(shape):
    # Grid-invariant weights / biases: the block index never changes, so the
    # default double-buffering only wastes VMEM -> single-buffer them.
    return pl.BlockSpec(shape, lambda *args: (0,) * len(shape),
                        pipeline_mode=pl.Buffered(1))


# --------------------------- kernel 1: LN1 + qkv ----------------------------

def _qkv_kernel(x_ref, g1_ref, b1_ref, wqkv_ref, q_ref, k_ref, v_ref, *,
                num_heads):
    x = x_ref[0].astype(jnp.float32)                       # (TS, C)
    ts, c = x.shape
    hd = c // num_heads

    h = _layernorm(x, g1_ref[0].astype(jnp.float32),
                   b1_ref[0].astype(jnp.float32))

    # bf16 operands, f32 MXU accumulation; softmax scale pre-folded into the
    # q-columns of W_qkv (trace time).  Cast the result to bf16 immediately.
    qkv = jnp.dot(h.astype(_BF16), wqkv_ref[...],
                  preferred_element_type=jnp.float32).astype(_BF16)  # (TS, 3C)

    # One head-major relayout per sequence tile (kept out of the flash loop).
    def head_major(z):
        return z.reshape(ts, num_heads, hd).swapaxes(0, 1)  # (H, TS, hd)

    q_ref[0] = head_major(qkv[:, 0 * c:1 * c])
    k_ref[0] = head_major(qkv[:, 1 * c:2 * c])
    v_ref[0] = head_major(qkv[:, 2 * c:3 * c])


# ------------------------ kernel 2: flash attention -------------------------

def _flash_attn_kernel(q_ref, k_ref, v_ref, o_ref, m_sc, l_sc, acc_sc):
    ki = pl.program_id(2)

    @pl.when(ki == 0)
    def _():
        m_sc[...] = jnp.full_like(m_sc, -jnp.inf)
        l_sc[...] = jnp.zeros_like(l_sc)
        acc_sc[...] = jnp.zeros_like(acc_sc)

    q = q_ref[0]                                            # (H, TQ, hd) bf16
    k = k_ref[0]                                            # (H, TK, hd) bf16
    v = v_ref[0]                                            # (H, TK, hd) bf16

    # TODO(synk): optional attention mask (masked_fill -1e12) not wired in.
    s = jnp.einsum("hqd,hkd->hqk", q, k,
                   preferred_element_type=jnp.float32)      # (H, TQ, TK) f32

    m_prev = m_sc[...]
    m_new = jnp.maximum(m_prev, jnp.max(s, axis=-1, keepdims=True))
    alpha = jnp.exp(m_prev - m_new)
    p = jnp.exp(s - m_new)
    l_sc[...] = alpha * l_sc[...] + jnp.sum(p, axis=-1, keepdims=True)
    acc_sc[...] = alpha * acc_sc[...] + jnp.einsum(
        "hqk,hkd->hqd", p.astype(_BF16), v, preferred_element_type=jnp.float32)
    m_sc[...] = m_new

    @pl.when(ki == pl.num_programs(2) - 1)
    def _():
        tq, c = o_ref.shape[1], o_ref.shape[2]
        # EUP reciprocal (approx) instead of a VPU divide; rows of the softmax
        # therefore sum to 1 only to ~1e-3 relative accuracy.
        o = acc_sc[...] * pl.reciprocal(l_sc[...], approx=True)  # (H, TQ, hd)
        o_ref[0] = o.swapaxes(0, 1).reshape(tq, c).astype(o_ref.dtype)


# ---------------- kernel 3: proj + residual + LN2 + MLP + residual ----------

def _proj_mlp_kernel(x_ref, a_ref, wp_ref, bp_ref, g2_ref, b2_ref,
                     w1_ref, bf1_ref, w2_ref, bf2_ref, o_ref):
    x = x_ref[0].astype(jnp.float32)                        # (TS, C) residual
    proj = jnp.dot(a_ref[0], wp_ref[...],
                   preferred_element_type=jnp.float32) + bp_ref[0].astype(jnp.float32)
    x1 = x + proj

    h2 = _layernorm(x1, g2_ref[0].astype(jnp.float32),
                    b2_ref[0].astype(jnp.float32))
    hid = jnp.dot(h2.astype(_BF16), w1_ref[...],
                  preferred_element_type=jnp.float32) + bf1_ref[0].astype(jnp.float32)
    hid = _gelu_exact(hid)
    mlp = jnp.dot(hid.astype(_BF16), w2_ref[...],
                  preferred_element_type=jnp.float32) + bf2_ref[0].astype(jnp.float32)

    o_ref[0] = (x1 + mlp).astype(o_ref.dtype)


# --------------------------------- wrapper ----------------------------------

def block_forward(x, params, *, num_heads, tq=None, tk=None, ts=None):
    B, N, C = x.shape
    Hm = params["w1"].shape[1]
    hd = C // num_heads
    scale = hd ** -0.5

    def pick(t):
        if t is None:
            t = 256 if N % 256 == 0 else N   # MXU-friendly default when possible
        assert N % t == 0, "TODO(synk): pad ragged sequence lengths"
        return t
    tq, tk, ts = pick(tq), pick(tk), pick(ts)

    # Trace-time weight prep (runs once in XLA, outside the kernels):
    #  - fold softmax scale into the q-columns of W_qkv
    #  - cast all matmul weights to bf16 (halves VMEM, full-rate MXU feed)
    wqkv = params["wqkv"].astype(jnp.float32).at[:, :C].multiply(scale).astype(_BF16)
    wp = params["wp"].astype(_BF16)
    w1 = params["w1"].astype(_BF16)
    w2 = params["w2"].astype(_BF16)

    vmem = _vmem_limit_bytes()
    cp2 = pltpu.CompilerParams(dimension_semantics=("parallel", "parallel"),
                               vmem_limit_bytes=vmem)
    cp3 = pltpu.CompilerParams(
        dimension_semantics=("parallel", "parallel", "arbitrary"),
        vmem_limit_bytes=vmem)

    itemsize = x.dtype.itemsize

    # ---- kernel 1: LN1 + qkv projection, head-major bf16 outputs ----
    hm_shape = jax.ShapeDtypeStruct((B, num_heads, N, hd), _BF16)
    q, k, v = pl.pallas_call(
        functools.partial(_qkv_kernel, num_heads=num_heads),
        out_shape=(hm_shape, hm_shape, hm_shape),
        grid_spec=pltpu.PrefetchScalarGridSpec(
            num_scalar_prefetch=0,
            grid=(B, N // ts),
            in_specs=[
                pl.BlockSpec((1, ts, C), lambda b, i: (b, i, 0)),   # x
                _const_spec((1, C)), _const_spec((1, C)),           # LN1 g/b
                _const_spec((C, 3 * C)),                            # W_qkv
            ],
            out_specs=tuple(
                pl.BlockSpec((1, num_heads, ts, hd), lambda b, i: (b, 0, i, 0))
                for _ in range(3)),
        ),
        compiler_params=cp2,
        cost_estimate=pl.CostEstimate(
            flops=2 * B * N * C * 3 * C,
            transcendentals=B * N,
            bytes_accessed=B * N * C * itemsize + C * 3 * C * 2 + 3 * B * N * C * 2),
    )(x, params["g1"], params["b1"], wqkv)

    # ---- kernel 2: flash attention (online softmax over KV tiles) ----
    attn = pl.pallas_call(
        _flash_attn_kernel,
        out_shape=jax.ShapeDtypeStruct((B, N, C), _BF16),
        grid_spec=pltpu.PrefetchScalarGridSpec(
            num_scalar_prefetch=0,
            grid=(B, N // tq, N // tk),
            in_specs=[
                pl.BlockSpec((1, num_heads, tq, hd), lambda b, qi, ki: (b, 0, qi, 0)),
                pl.BlockSpec((1, num_heads, tk, hd), lambda b, qi, ki: (b, 0, ki, 0)),
                pl.BlockSpec((1, num_heads, tk, hd), lambda b, qi, ki: (b, 0, ki, 0)),
            ],
            out_specs=pl.BlockSpec((1, tq, C), lambda b, qi, ki: (b, qi, 0)),
            scratch_shapes=[
                pltpu.VMEM((num_heads, tq, 1), jnp.float32),    # running max
                pltpu.VMEM((num_heads, tq, 1), jnp.float32),    # running denom
                pltpu.VMEM((num_heads, tq, hd), jnp.float32),   # accumulator
            ],
        ),
        compiler_params=cp3,
        cost_estimate=pl.CostEstimate(
            flops=4 * B * N * N * C,
            transcendentals=B * num_heads * N * N,
            bytes_accessed=2 * B * N * C * 2 * (N // tq) + 2 * B * N * C * 2),
    )(q, k, v)

    # ---- kernel 3: proj + residual + LN2 + MLP + residual ----
    out = pl.pallas_call(
        _proj_mlp_kernel,
        out_shape=jax.ShapeDtypeStruct((B, N, C), x.dtype),
        grid_spec=pltpu.PrefetchScalarGridSpec(
            num_scalar_prefetch=0,
            grid=(B, N // ts),
            in_specs=[
                pl.BlockSpec((1, ts, C), lambda b, i: (b, i, 0)),   # x (residual)
                pl.BlockSpec((1, ts, C), lambda b, i: (b, i, 0)),   # attn out
                _const_spec((C, C)), _const_spec((1, C)),           # W_proj, b_proj
                _const_spec((1, C)), _const_spec((1, C)),           # LN2 g/b
                _const_spec((C, Hm)), _const_spec((1, Hm)),         # fc1
                _const_spec((Hm, C)), _const_spec((1, C)),          # fc2
            ],
            out_specs=pl.BlockSpec((1, ts, C), lambda b, i: (b, i, 0)),
        ),
        compiler_params=cp2,
        cost_estimate=pl.CostEstimate(
            flops=2 * B * N * (C * C + 2 * C * Hm),
            transcendentals=B * N * Hm,
            bytes_accessed=2 * B * N * C * itemsize + B * N * C * 2
                           + (C * C + 2 * C * Hm) * 2),
    )(x, attn, wp, params["bp"], params["g2"], params["b2"],
      w1, params["bf1"], w2, params["bf2"])
    return out


# ------------------------------ reference / test ----------------------------

def reference_forward(x, params, *, num_heads):
    """Pure-JAX f32 reference matching the PyTorch Block semantics."""
    B, N, C = x.shape
    hd = C // num_heads
    scale = hd ** -0.5

    def ln(z, g, b):
        mu = jnp.mean(z, axis=-1, keepdims=True)
        var = jnp.mean((z - mu) ** 2, axis=-1, keepdims=True)
        return (z - mu) / jnp.sqrt(var + 1e-5) * g + b

    h = ln(x, params["g1"][0], params["b1"][0])
    qkv = h @ params["wqkv"]
    qkv = qkv.reshape(B, N, 3, num_heads, hd).transpose(2, 0, 3, 1, 4)
    q, k, v = qkv[0], qkv[1], qkv[2]
    attn = jnp.einsum("bhqd,bhkd->bhqk", q, k) * scale
    attn = jax.nn.softmax(attn, axis=-1)
    out = jnp.einsum("bhqk,bhkd->bhqd", attn, v)
    out = out.transpose(0, 2, 1, 3).reshape(B, N, C)
    x1 = x + (out @ params["wp"] + params["bp"][0])

    h2 = ln(x1, params["g2"][0], params["b2"][0])
    hid = jax.nn.gelu(h2 @ params["w1"] + params["bf1"][0], approximate=False)
    mlp = hid @ params["w2"] + params["bf2"][0]
    return x1 + mlp


def make_params(key, dim, num_heads, mlp_ratio=4.0, dtype=jnp.float32):
    H = int(dim * mlp_ratio)
    ks = jax.random.split(key, 6)
    s = 0.02
    return {
        "g1": jnp.ones((1, dim), dtype),
        "b1": jnp.zeros((1, dim), dtype),
        "wqkv": (s * jax.random.normal(ks[0], (dim, 3 * dim))).astype(dtype),
        "wp": (s * jax.random.normal(ks[1], (dim, dim))).astype(dtype),
        "bp": (s * jax.random.normal(ks[2], (1, dim))).astype(dtype),
        "g2": jnp.ones((1, dim), dtype),
        "b2": jnp.zeros((1, dim), dtype),
        "w1": (s * jax.random.normal(ks[3], (dim, H))).astype(dtype),
        "bf1": jnp.zeros((1, H), dtype),
        "w2": (s * jax.random.normal(ks[4], (H, dim))).astype(dtype),
        "bf2": jnp.zeros((1, dim), dtype),
    }


if __name__ == "__main__":
    B, N, C = 2, 16, 32
    num_heads = 4

    key = jax.random.PRNGKey(0)
    kx, kp = jax.random.split(key)
    x = jax.random.normal(kx, (B, N, C), dtype=jnp.float32)
    params = make_params(kp, C, num_heads)

    # Small tiles so the flash online-softmax path iterates multiple q/kv tiles.
    out = block_forward(x, params, num_heads=num_heads, tq=8, tk=8, ts=8)
    out = jax.block_until_ready(out)

    ref = reference_forward(x, params, num_heads=num_heads)
    assert out.shape == (B, N, C)
    # bf16 MXU operands (f32 accumulation) + approx reciprocal -> relaxed tol.
    err = jnp.max(jnp.abs(out - ref))
    assert jnp.allclose(out, ref, atol=2e-2, rtol=2e-2), f"max err {err}"

    print("KERNEL_OK")
</pallas_src>

<mosaic_0001>
module attributes {stable_mosaic.version = 11 : i64} {
  func.func @_qkv_kernel(%arg0: i32, %arg1: i32, %arg2: memref<1x8x32xf32, #tpu.memory_space<vmem>>, %arg3: memref<1x32xf32, #tpu.memory_space<vmem>>, %arg4: memref<1x32xf32, #tpu.memory_space<vmem>>, %arg5: memref<32x96xbf16, #tpu.memory_space<vmem>>, %arg6: memref<1x4x8x8xbf16, #tpu.memory_space<vmem>>, %arg7: memref<1x4x8x8xbf16, #tpu.memory_space<vmem>>, %arg8: memref<1x4x8x8xbf16, #tpu.memory_space<vmem>>) attributes {dimension_semantics = [#tpu.dimension_semantics<parallel>, #tpu.dimension_semantics<parallel>], iteration_bounds = array<i64: 2, 2>, scalar_prefetch = 0 : i64, scratch_operands = 0 : i64, tpu.core_type = #tpu.core_type<tc>, window_params = [{transform_indices = @transform_0, window_bounds = array<i64: 1, 8, 32>}, {pipeline_mode = #tpu.pipeline_mode<synchronous>, transform_indices = @transform_1, window_bounds = array<i64: 1, 32>}, {pipeline_mode = #tpu.pipeline_mode<synchronous>, transform_indices = @transform_2, window_bounds = array<i64: 1, 32>}, {pipeline_mode = #tpu.pipeline_mode<synchronous>, transform_indices = @transform_3, window_bounds = array<i64: 32, 96>}, {transform_indices = @transform_4, window_bounds = array<i64: 1, 4, 8, 8>}, {transform_indices = @transform_5, window_bounds = array<i64: 1, 4, 8, 8>}, {transform_indices = @transform_6, window_bounds = array<i64: 1, 4, 8, 8>}]} {
    %c0 = arith.constant 0 : index
    %c0_0 = arith.constant 0 : index
    %c0_1 = arith.constant 0 : index
    %0 = vector.load %arg2[%c0, %c0_0, %c0_1] : memref<1x8x32xf32, #tpu.memory_space<vmem>>, vector<1x8x32xf32>
    %1 = vector.shape_cast %0 : vector<1x8x32xf32> to vector<8x32xf32>
    %c0_2 = arith.constant 0 : index
    %c0_3 = arith.constant 0 : index
    %2 = vector.load %arg3[%c0_2, %c0_3] : memref<1x32xf32, #tpu.memory_space<vmem>>, vector<1x32xf32>
    %3 = vector.shape_cast %2 : vector<1x32xf32> to vector<32xf32>
    %c0_4 = arith.constant 0 : index
    %c0_5 = arith.constant 0 : index
    %4 = vector.load %arg4[%c0_4, %c0_5] : memref<1x32xf32, #tpu.memory_space<vmem>>, vector<1x32xf32>
    %5 = vector.shape_cast %4 : vector<1x32xf32> to vector<32xf32>
    %cst = arith.constant dense<0.000000e+00> : vector<8xf32>
    %6 = vector.multi_reduction <add>, %1, %cst [1] : vector<8x32xf32> to vector<8xf32>
    %7 = vector.shape_cast %6 : vector<8xf32> to vector<8x1xf32>
    %cst_6 = arith.constant 3.200000e+01 : f32
    %8 = vector.broadcast %cst_6 : f32 to vector<8x1xf32>
    %9 = arith.divf %7, %8 : vector<8x1xf32>
    %10 = vector.broadcast %9 : vector<8x1xf32> to vector<8x32xf32>
    %11 = arith.subf %1, %10 : vector<8x32xf32>
    %12 = arith.mulf %11, %11 : vector<8x32xf32>
    %cst_7 = arith.constant dense<0.000000e+00> : vector<8xf32>
    %13 = vector.multi_reduction <add>, %12, %cst_7 [1] : vector<8x32xf32> to vector<8xf32>
    %14 = vector.shape_cast %13 : vector<8xf32> to vector<8x1xf32>
    %cst_8 = arith.constant 3.200000e+01 : f32
    %15 = vector.broadcast %cst_8 : f32 to vector<8x1xf32>
    %16 = arith.divf %14, %15 : vector<8x1xf32>
    %17 = vector.broadcast %9 : vector<8x1xf32> to vector<8x32xf32>
    %18 = arith.subf %1, %17 : vector<8x32xf32>
    %cst_9 = arith.constant 9.99999974E-6 : f32
    %19 = vector.broadcast %cst_9 : f32 to vector<8x1xf32>
    %20 = arith.addf %16, %19 : vector<8x1xf32>
    %21 = math.rsqrt %20 : vector<8x1xf32>
    %22 = vector.broadcast %21 : vector<8x1xf32> to vector<8x32xf32>
    %23 = arith.mulf %18, %22 : vector<8x32xf32>
    %24 = vector.shape_cast %3 : vector<32xf32> to vector<1x32xf32>
    %25 = vector.broadcast %24 : vector<1x32xf32> to vector<8x32xf32>
    %26 = arith.mulf %23, %25 : vector<8x32xf32>
    %27 = vector.shape_cast %5 : vector<32xf32> to vector<1x32xf32>
    %28 = vector.broadcast %27 : vector<1x32xf32> to vector<8x32xf32>
    %29 = arith.addf %26, %28 : vector<8x32xf32>
    %30 = arith.truncf %29 : vector<8x32xf32> to vector<8x32xbf16>
    %c0_10 = arith.constant 0 : index
    %c0_11 = arith.constant 0 : index
    %31 = vector.load %arg5[%c0_10, %c0_11] : memref<32x96xbf16, #tpu.memory_space<vmem>>, vector<32x96xbf16>
    %cst_12 = arith.constant dense<0.000000e+00> : vector<8x96xf32>
    %32 = tpu.matmul %30, %31, %cst_12 {dimension_numbers = #tpu.dot_dimension_numbers<[1], [0], [0], [1], [0, 0, 1, 1], [], []>} : vector<8x32xbf16>, vector<32x96xbf16>, vector<8x96xf32> -> vector<8x96xf32>
    %33 = arith.truncf %32 : vector<8x96xf32> to vector<8x96xbf16>
    %34 = vector.extract_strided_slice %33 {offsets = [0, 0], sizes = [8, 32], strides = [1, 1]} : vector<8x96xbf16> to vector<8x32xbf16>
    %35 = vector.shape_cast %34 : vector<8x32xbf16> to vector<8x4x8xbf16>
    %36 = tpu.transpose %35, [1, 0, 2] : vector<8x4x8xbf16> -> vector<4x8x8xbf16>
    %c0_13 = arith.constant 0 : index
    %c0_14 = arith.constant 0 : index
    %c0_15 = arith.constant 0 : index
    %c0_16 = arith.constant 0 : index
    %37 = vector.load %arg6[%c0_13, %c0_14, %c0_15, %c0_16] : memref<1x4x8x8xbf16, #tpu.memory_space<vmem>>, vector<1x4x8x8xbf16>
    %38 = vector.shape_cast %37 : vector<1x4x8x8xbf16> to vector<4x8x8xbf16>
    %39 = vector.shape_cast %36 : vector<4x8x8xbf16> to vector<1x4x8x8xbf16>
    tpu.vector_store %arg6[%c0_13, %c0_14, %c0_15, %c0_16], %39 {strides = array<i32>} : memref<1x4x8x8xbf16, #tpu.memory_space<vmem>>, vector<1x4x8x8xbf16>,
    %40 = vector.extract_strided_slice %33 {offsets = [0, 32], sizes = [8, 32], strides = [1, 1]} : vector<8x96xbf16> to vector<8x32xbf16>
    %41 = vector.shape_cast %40 : vector<8x32xbf16> to vector<8x4x8xbf16>
    %42 = tpu.transpose %41, [1, 0, 2] : vector<8x4x8xbf16> -> vector<4x8x8xbf16>
    %c0_17 = arith.constant 0 : index
    %c0_18 = arith.constant 0 : index
    %c0_19 = arith.constant 0 : index
    %c0_20 = arith.constant 0 : index
    %43 = vector.load %arg7[%c0_17, %c0_18, %c0_19, %c0_20] : memref<1x4x8x8xbf16, #tpu.memory_space<vmem>>, vector<1x4x8x8xbf16>
    %44 = vector.shape_cast %43 : vector<1x4x8x8xbf16> to vector<4x8x8xbf16>
    %45 = vector.shape_cast %42 : vector<4x8x8xbf16> to vector<1x4x8x8xbf16>
    tpu.vector_store %arg7[%c0_17, %c0_18, %c0_19, %c0_20], %45 {strides = array<i32>} : memref<1x4x8x8xbf16, #tpu.memory_space<vmem>>, vector<1x4x8x8xbf16>,
    %46 = vector.extract_strided_slice %33 {offsets = [0, 64], sizes = [8, 32], strides = [1, 1]} : vector<8x96xbf16> to vector<8x32xbf16>
    %47 = vector.shape_cast %46 : vector<8x32xbf16> to vector<8x4x8xbf16>
    %48 = tpu.transpose %47, [1, 0, 2] : vector<8x4x8xbf16> -> vector<4x8x8xbf16>
    %c0_21 = arith.constant 0 : index
    %c0_22 = arith.constant 0 : index
    %c0_23 = arith.constant 0 : index
    %c0_24 = arith.constant 0 : index
    %49 = vector.load %arg8[%c0_21, %c0_22, %c0_23, %c0_24] : memref<1x4x8x8xbf16, #tpu.memory_space<vmem>>, vector<1x4x8x8xbf16>
    %50 = vector.shape_cast %49 : vector<1x4x8x8xbf16> to vector<4x8x8xbf16>
    %51 = vector.shape_cast %48 : vector<4x8x8xbf16> to vector<1x4x8x8xbf16>
    tpu.vector_store %arg8[%c0_21, %c0_22, %c0_23, %c0_24], %51 {strides = array<i32>} : memref<1x4x8x8xbf16, #tpu.memory_space<vmem>>, vector<1x4x8x8xbf16>,
    return
  }
  func.func @transform_0(%arg0: i32, %arg1: i32) -> (i32, i32, i32) {
    %c0_i32 = arith.constant 0 : i32
    %c0_i32_0 = arith.constant 0 : i32
    return %arg0, %arg1, %c0_i32 : i32, i32, i32
  }
  func.func @transform_1(%arg0: i32, %arg1: i32) -> (i32, i32) {
    %c0_i32 = arith.constant 0 : i32
    %c0_i32_0 = arith.constant 0 : i32
    %c0_i32_1 = arith.constant 0 : i32
    return %c0_i32, %c0_i32_0 : i32, i32
  }
  func.func @transform_2(%arg0: i32, %arg1: i32) -> (i32, i32) {
    %c0_i32 = arith.constant 0 : i32
    %c0_i32_0 = arith.constant 0 : i32
    %c0_i32_1 = arith.constant 0 : i32
    return %c0_i32, %c0_i32_0 : i32, i32
  }
  func.func @transform_3(%arg0: i32, %arg1: i32) -> (i32, i32) {
    %c0_i32 = arith.constant 0 : i32
    %c0_i32_0 = arith.constant 0 : i32
    %c0_i32_1 = arith.constant 0 : i32
    return %c0_i32, %c0_i32_0 : i32, i32
  }
  func.func @transform_4(%arg0: i32, %arg1: i32) -> (i32, i32, i32, i32) {
    %c0_i32 = arith.constant 0 : i32
    %c0_i32_0 = arith.constant 0 : i32
    %c0_i32_1 = arith.constant 0 : i32
    return %arg0, %c0_i32, %arg1, %c0_i32_0 : i32, i32, i32, i32
  }
  func.func @transform_5(%arg0: i32, %arg1: i32) -> (i32, i32, i32, i32) {
    %c0_i32 = arith.constant 0 : i32
    %c0_i32_0 = arith.constant 0 : i32
    %c0_i32_1 = arith.constant 0 : i32
    return %arg0, %c0_i32, %arg1, %c0_i32_0 : i32, i32, i32, i32
  }
  func.func @transform_6(%arg0: i32, %arg1: i32) -> (i32, i32, i32, i32) {
    %c0_i32 = arith.constant 0 : i32
    %c0_i32_0 = arith.constant 0 : i32
    %c0_i32_1 = arith.constant 0 : i32
    return %arg0, %c0_i32, %arg1, %c0_i32_0 : i32, i32, i32, i32
  }
}

</mosaic_0001>

<llo_original>
// kernel: tpu_custom_call.1
$region0: #{tpu_custom_call.1}
  #allocation0 [shape = 'u32[]', space=smem, size = 0x4, offset = 0x4, fixed_abs, tag = 'smem constant byte address 0x4 - core index']
  #allocation1 [shape = 'u32[144,128]{1,0:T(1,128)}', space=vmem, size = 0x12000, scoped, tag = 'internal scratch']
  %s0 = inlined_call_operand.hbm [shape: f32[2,16,32], index: 0, kind: input, shape index: {}]
  %s1 = inlined_call_operand.hbm [shape: f32[1,32], index: 1, kind: input, shape index: {}]
  %s2 = inlined_call_operand.hbm [shape: f32[1,32], index: 2, kind: input, shape index: {}]
  %s3 = inlined_call_operand.hbm [shape: bf16[32,96], index: 3, kind: input, shape index: {}]
  %s4 = inlined_call_operand.hbm [shape: bf16[2,4,16,8], index: 4, kind: output, shape index: {0}]
  %s5 = inlined_call_operand.hbm [shape: bf16[2,4,16,8], index: 5, kind: output, shape index: {1}]
  %s6 = inlined_call_operand.hbm [shape: bf16[2,4,16,8], index: 6, kind: output, shape index: {2}]
  %7 = xla_tuple %s4, %s5, %s6
  %s8 = sld [smem:[#allocation0]]
  $region81: #{tpu_custom_call.1} parent=0
    _
  %s10 = ssub.s32 1, %s8
  %s11 = scalar_select 0, %s10, %s8
  $region1: #{tpu_custom_call.1} parent=0
    #allocation2 [shape = 'u8[8192]{0}', space=vmem, size = 0x2000, scoped, tag = 'input window, operand 0']
    #allocation3 [shape = 's32[2]{0}', space=sflag, size = 0x8, scoped, tag = 'scoped memory for tpu_custom_call.1']
    #allocation4 [shape = 's32[2]{0}', space=sflag, size = 0x8, scoped, tag = 'scoped memory for tpu_custom_call.1']
    #allocation5 [shape = 'u8[512]{0}', space=vmem, size = 0x400, scoped, tag = 'input window, operand 1, single buffered']
    #allocation6 [shape = 's32[1]{0}', space=sflag, size = 0x4, scoped, tag = 'scoped memory for tpu_custom_call.1']
    #allocation7 [shape = 'u8[512]{0}', space=vmem, size = 0x400, scoped, tag = 'input window, operand 2, single buffered']
    #allocation8 [shape = 'u8[8192]{0}', space=vmem, size = 0x2000, scoped, tag = 'input window, operand 3, single buffered']
    #allocation9 [shape = 's32[1]{0}', space=sflag, size = 0x4, scoped, tag = 'scoped memory for tpu_custom_call.1']
    #allocation10 [shape = 'u8[16384]{0}', space=vmem, size = 0x4000, scoped, tag = 'output window, operand 0']
    #allocation11 [shape = 'u8[16384]{0}', space=vmem, size = 0x4000, scoped, tag = 'output window, operand 1']
    #allocation12 [shape = 's32[2]{0}', space=sflag, size = 0x8, scoped, tag = 'scoped memory for tpu_custom_call.1']
    #allocation13 [shape = 'u8[16384]{0}', space=vmem, size = 0x4000, scoped, tag = 'output window, operand 2']
    %12 = vsyncpa [#allocation3], 0
    %s13 = scalar_lea.sflag [#allocation3], 1
    %14 = vsyncpa %s13, 0
    %15 = vsyncpa [#allocation6], 0
    %16 = vsyncpa [#allocation9], 0
    %17 = vsyncpa [#allocation4], 0
    %s18 = scalar_lea.sflag [#allocation4], 1
    %19 = vsyncpa %s18, 0
    %20 = vsyncpa [#allocation12], 0
    %s21 = scalar_lea.sflag [#allocation12], 1
    %22 = vsyncpa %s21, 0
    loop: start=0, step=1, limit=6
    $region2: #{tpu_custom_call.1} parent=1 // loop_pre_header
      _
    $region3: #{tpu_custom_call.1} parent=1 // loop_header
      %s24 = sphi 0, %s28
      %p25 = scmp.ge.s32.totalorder %s24, 6
      %s31 = sphi 0, %s43
      %s32 = sphi 0, %s39
      %s33 = sphi 0, %s31
      %s34 = sphi 0, %s32
      %s35 = sphi 0, %s33
      %s36 = sphi 0, %s34
      %s48 = sphi 0, %s50
      %s51 = sphi 0, %s48
      %s52 = sphi 0, %s51
      %s68 = sphi 0, %s52
      %s72 = sphi 0, %s72
      %s74 = sphi 0, %s72
      %s75 = sphi 0, %s74
      %s89 = sphi 0, %s75
      %s93 = sphi 0, %s93
      %s95 = sphi 0, %s93
      %s96 = sphi 0, %s95
      %s110 = sphi 0, %s96
      %s114 = sphi 0, %s114
      %s116 = sphi 0, %s114
      %s117 = sphi 0, %s116
      %s131 = sphi 0, %s117
      %s139 = sphi 0, %s141
      %s142 = sphi 0, %s139
      %s143 = sphi 0, %s142
      %s159 = sphi 0, %s143
      %s167 = sphi 0, %s169
      %s170 = sphi 0, %s167
      %s171 = sphi 0, %s170
      %s187 = sphi 0, %s171
      %s195 = sphi 0, %s197
      %s198 = sphi 0, %s195
      %s199 = sphi 0, %s198
      %s215 = sphi 0, %s199
    $region4: #{tpu_custom_call.1} parent=1 // loop_header_branch
      %27 = sbr.rel (%p25) target = $region8
    $region5: #{tpu_custom_call.1} parent=1 // loop_body
      %s29 = ssub.s32 %s24, 1
      %s30 = ssub.s32 %s24, 2
      %s37 = sadd.s32 1, %s32
      %p38 = scmp.ge.s32.totalorder %s37, 2
      %s39 = scalar_select %p38, 0, %s37
      %s40 = sadd.s32 1, %s31
      %s41 = scalar_select %p38, %s40, %s31
      %p42 = scmp.ge.s32.totalorder %s41, 2
      %s43 = scalar_select %p42, 0, %s41
      %s44 = ssub.s32 %s31, %s43
      %s45 = ssub.s32 %s32, %s39
      %s46 = sor.u32 %s44, %s45
      %p47 = scmp.eq.s32.totalorder %s46, 0
      %s49 = sadd.s32 %s48, 1
      %s50 = scalar_select %p47, %s48, %s49
      %p53 = pneg %p47
      %p54 = scmp.eq.s32.totalorder %s24, 3
      %p55 = por %p53, %p54
      %p56 = scmp.ne.s32.totalorder %s48, %s51
      %p57 = scmp.eq.s32.totalorder %s24, 0
      %p58 = por %p56, %p57
      %p59 = scmp.ne.s32.totalorder %s48, %s51
      %p60 = scmp.eq.s32.totalorder %s29, 3
      %p61 = por %p59, %p60
      %p62 = scmp.ne.s32.totalorder %s51, %s52
      %p63 = scmp.eq.s32.totalorder %s29, 0
      %p64 = por %p62, %p63
      %p65 = scmp.ne.s32.totalorder %s51, %s52
      %p66 = scmp.eq.s32.totalorder %s30, 3
      %p67 = por %p65, %p66
      %p69 = scmp.ne.s32.totalorder %s52, %s68
      %p70 = scmp.eq.s32.totalorder %s30, 0
      %p71 = por %p69, %p70
      %s73 = sadd.s32 %s72, 1
      %p76 = scmp.eq.s32.totalorder %s24, 3
      %p77 = scmp.ne.s32.totalorder %s72, %s74
      %p78 = scmp.eq.s32.totalorder %s24, 0
      %p79 = por %p77, %p78
      %p80 = scmp.ne.s32.totalorder %s72, %s74
      %p81 = scmp.eq.s32.totalorder %s29, 3
      %p82 = por %p80, %p81
      %p83 = scmp.ne.s32.totalorder %s74, %s75
      %p84 = scmp.eq.s32.totalorder %s29, 0
      %p85 = por %p83, %p84
      %p86 = scmp.ne.s32.totalorder %s74, %s75
      %p87 = scmp.eq.s32.totalorder %s30, 3
      %p88 = por %p86, %p87
      %p90 = scmp.ne.s32.totalorder %s75, %s89
      %p91 = scmp.eq.s32.totalorder %s30, 0
      %p92 = por %p90, %p91
      %s94 = sadd.s32 %s93, 1
      %p97 = scmp.eq.s32.totalorder %s24, 3
      %p98 = scmp.ne.s32.totalorder %s93, %s95
      %p99 = scmp.eq.s32.totalorder %s24, 0
      %p100 = por %p98, %p99
      %p101 = scmp.ne.s32.totalorder %s93, %s95
      %p102 = scmp.eq.s32.totalorder %s29, 3
      %p103 = por %p101, %p102
      %p104 = scmp.ne.s32.totalorder %s95, %s96
      %p105 = scmp.eq.s32.totalorder %s29, 0
      %p106 = por %p104, %p105
      %p107 = scmp.ne.s32.totalorder %s95, %s96
      %p108 = scmp.eq.s32.totalorder %s30, 3
      %p109 = por %p107, %p108
      %p111 = scmp.ne.s32.totalorder %s96, %s110
      %p112 = scmp.eq.s32.totalorder %s30, 0
      %p113 = por %p111, %p112
      %s115 = sadd.s32 %s114, 1
      %p118 = scmp.eq.s32.totalorder %s24, 3
      %p119 = scmp.ne.s32.totalorder %s114, %s116
      %p120 = scmp.eq.s32.totalorder %s24, 0
      %p121 = por %p119, %p120
      %p122 = scmp.ne.s32.totalorder %s114, %s116
      %p123 = scmp.eq.s32.totalorder %s29, 3
      %p124 = por %p122, %p123
      %p125 = scmp.ne.s32.totalorder %s116, %s117
      %p126 = scmp.eq.s32.totalorder %s29, 0
      %p127 = por %p125, %p126
      %p128 = scmp.ne.s32.totalorder %s116, %s117
      %p129 = scmp.eq.s32.totalorder %s30, 3
      %p130 = por %p128, %p129
      %p132 = scmp.ne.s32.totalorder %s117, %s131
      %p133 = scmp.eq.s32.totalorder %s30, 0
      %p134 = por %p132, %p133
      %s135 = ssub.s32 %s31, %s43
      %s136 = ssub.s32 %s32, %s39
      %s137 = sor.u32 %s135, %s136
      %p138 = scmp.eq.s32.totalorder %s137, 0
      %s140 = sadd.s32 %s139, 1
      %s141 = scalar_select %p138, %s139, %s140
      %p144 = pneg %p138
      %p145 = scmp.eq.s32.totalorder %s24, 3
      %p146 = por %p144, %p145
      %p147 = scmp.ne.s32.totalorder %s139, %s142
      %p148 = scmp.eq.s32.totalorder %s24, 0
      %p149 = por %p147, %p148
      %p150 = scmp.ne.s32.totalorder %s139, %s142
      %p151 = scmp.eq.s32.totalorder %s29, 3
      %p152 = por %p150, %p151
      %p153 = scmp.ne.s32.totalorder %s142, %s143
      %p154 = scmp.eq.s32.totalorder %s29, 0
      %p155 = por %p153, %p154
      %p156 = scmp.ne.s32.totalorder %s142, %s143
      %p157 = scmp.eq.s32.totalorder %s30, 3
      %p158 = por %p156, %p157
      %p160 = scmp.ne.s32.totalorder %s143, %s159
      %p161 = scmp.eq.s32.totalorder %s30, 0
      %p162 = por %p160, %p161
      %s163 = ssub.s32 %s31, %s43
      %s164 = ssub.s32 %s32, %s39
      %s165 = sor.u32 %s163, %s164
      %p166 = scmp.eq.s32.totalorder %s165, 0
      %s168 = sadd.s32 %s167, 1
      %s169 = scalar_select %p166, %s167, %s168
      %p172 = pneg %p166
      %p173 = scmp.eq.s32.totalorder %s24, 3
      %p174 = por %p172, %p173
      %p175 = scmp.ne.s32.totalorder %s167, %s170
      %p176 = scmp.eq.s32.totalorder %s24, 0
      %p177 = por %p175, %p176
      %p178 = scmp.ne.s32.totalorder %s167, %s170
      %p179 = scmp.eq.s32.totalorder %s29, 3
      %p180 = por %p178, %p179
      %p181 = scmp.ne.s32.totalorder %s170, %s171
      %p182 = scmp.eq.s32.totalorder %s29, 0
      %p183 = por %p181, %p182
      %p184 = scmp.ne.s32.totalorder %s170, %s171
      %p185 = scmp.eq.s32.totalorder %s30, 3
      %p186 = por %p184, %p185
      %p188 = scmp.ne.s32.totalorder %s171, %s187
      %p189 = scmp.eq.s32.totalorder %s30, 0
      %p190 = por %p188, %p189
      %s191 = ssub.s32 %s31, %s43
      %s192 = ssub.s32 %s32, %s39
      %s193 = sor.u32 %s191, %s192
      %p194 = scmp.eq.s32.totalorder %s193, 0
      %s196 = sadd.s32 %s195, 1
      %s197 = scalar_select %p194, %s195, %s196
      %p200 = pneg %p194
      %p201 = scmp.eq.s32.totalorder %s24, 3
      %p202 = por %p200, %p201
      %p203 = scmp.ne.s32.totalorder %s195, %s198
      %p204 = scmp.eq.s32.totalorder %s24, 0
      %p205 = por %p203, %p204
      %p206 = scmp.ne.s32.totalorder %s195, %s198
      %p207 = scmp.eq.s32.totalorder %s29, 3
      %p208 = por %p206, %p207
      %p209 = scmp.ne.s32.totalorder %s198, %s199
      %p210 = scmp.eq.s32.totalorder %s29, 0
      %p211 = por %p209, %p210
      %p212 = scmp.ne.s32.totalorder %s198, %s199
      %p213 = scmp.eq.s32.totalorder %s30, 3
      %p214 = por %p212, %p213
      %p216 = scmp.ne.s32.totalorder %s199, %s215
      %p217 = scmp.eq.s32.totalorder %s30, 0
      %p218 = por %p216, %p217
      %p219 = scmp.le.s32.totalorder 1, %s24
      %p220 = scmp.lt.s32.totalorder %s24, 5
      %p221 = pnand %p219, %p220
      %p222 = pneg %p221
      // Predicated region
      $region9: #{tpu_custom_call.1} parent=5 // pred_check
        _
      $region10: #{tpu_custom_call.1} parent=5 // pred_check_branch
        %224 = sbr.rel (%p221) target = $region12
      $region11: #{tpu_custom_call.1} parent=5 // pred_region
        %s225 = ssub.s32 %s24, 1
        // Predicated region
        $region13: #{tpu_custom_call.1} parent=11 // pred_check
          %p226 = pneg %p85
        $region14: #{tpu_custom_call.1} parent=11 // pred_check_branch
          %228 = sbr.rel (%p226) target = $region16
        $region15: #{tpu_custom_call.1} parent=11 // pred_region
          %s230 = ssub.s32 16, 16
          %231 = vsyncadd [#allocation6], %s230
          %s233 = sshll.u32 [#allocation5], 4
          %s234 = int_to_ptr.vmem [resolvable:$true] %s233
          %236 = dma.hbm_to_vmem [thread:$0]  %s1, 16, %s234, [#allocation6]
        $region16: #{tpu_custom_call.1} parent=11 // pred_fallthru
          _
        // Predicated region
        $region17: #{tpu_custom_call.1} parent=11 // pred_check
          %p237 = pneg %p106
        $region18: #{tpu_custom_call.1} parent=11 // pred_check_branch
          %239 = sbr.rel (%p237) target = $region20
        $region19: #{tpu_custom_call.1} parent=11 // pred_region
          %s241 = ssub.s32 16, 16
          %242 = vsyncadd [#allocation6], %s241
          %s244 = sshll.u32 [#allocation7], 4
          %s245 = int_to_ptr.vmem [resolvable:$true] %s244
          %247 = dma.hbm_to_vmem [thread:$0]  %s2, 16, %s245, [#allocation6]
        $region20: #{tpu_custom_call.1} parent=11 // pred_fallthru
          _
        // Predicated region
        $region21: #{tpu_custom_call.1} parent=11 // pred_check
          %p248 = pneg %p127
        $region22: #{tpu_custom_call.1} parent=11 // pred_check_branch
          %250 = sbr.rel (%p248) target = $region24
        $region23: #{tpu_custom_call.1} parent=11 // pred_region
          %s252 = ssub.s32 256, 256
          %253 = vsyncadd [#allocation9], %s252
          %s254 = sshll.u32 [#allocation8], 4
          %s255 = int_to_ptr.vmem [resolvable:$true] %s254
          %260 = dma.hbm_to_vmem [thread:$0]  %s3, 256, %s255, [#allocation9], 64, 64, 4
        $region24: #{tpu_custom_call.1} parent=11 // pred_fallthru
          _
      $region12: #{tpu_custom_call.1} parent=5 // pred_fallthru
        _
      %p261 = scmp.lt.s32.totalorder %s24, 4
      // Predicated region
      $region25: #{tpu_custom_call.1} parent=5 // pred_check
        %p262 = pneg %p261
      $region26: #{tpu_custom_call.1} parent=5 // pred_check_branch
        %264 = sbr.rel (%p262) target = $region28
      $region27: #{tpu_custom_call.1} parent=5 // pred_region
        // Predicated region
        $region29: #{tpu_custom_call.1} parent=27 // pred_check
          %p265 = pneg %p58
        $region30: #{tpu_custom_call.1} parent=27 // pred_check_branch
          %267 = sbr.rel (%p265) target = $region32
        $region31: #{tpu_custom_call.1} parent=27 // pred_region
          %s268 = sand.u32 %s48, 1
          %s269 = scalar_lea.sflag [#allocation3], %s268
          %s270 = sand.u32 %s48, 1
          %s271 = smul.addr %s270, 8
          %s272 = scalar_lea.vmem [#allocation2], %s271
          %s274 = ssub.s32 128, 128
          %275 = vsyncadd %s269, %s274
          %s276 = smul.addr %s31, 2
          %s277 = sadd.s32 %s32, %s276
          %s278 = smul.addr %s277, 128
          %s279 = scalar_lea.hbm %s0, %s278
          %s281 = sshll.u32 %s272, 4
          %s282 = int_to_ptr.vmem [resolvable:$true] %s281
          %284 = dma.hbm_to_vmem [thread:$0]  %s279, 128, %s282, %s269
        $region32: #{tpu_custom_call.1} parent=27 // pred_fallthru
          _
      $region28: #{tpu_custom_call.1} parent=5 // pred_fallthru
        _
      %p285 = scmp.le.s32.totalorder 1, %s24
      %p286 = scmp.lt.s32.totalorder %s24, 5
      %p287 = pnand %p285, %p286
      %p288 = pneg %p287
      // Predicated region
      $region33: #{tpu_custom_call.1} parent=5 // pred_check
        _
      $region34: #{tpu_custom_call.1} parent=5 // pred_check_branch
        %290 = sbr.rel (%p287) target = $region36
      $region35: #{tpu_custom_call.1} parent=5 // pred_region
        %s291 = ssub.s32 %s24, 1
        %s292 = sand.u32 %s51, 1
        %s293 = scalar_lea.sflag [#allocation3], %s292
        %s294 = sand.u32 %s51, 1
        %s295 = smul.addr %s294, 8
        %s296 = scalar_lea.vmem [#allocation2], %s295
        // Predicated region
        $region37: #{tpu_custom_call.1} parent=35 // pred_check
          %p297 = pneg %p64
        $region38: #{tpu_custom_call.1} parent=35 // pred_check_branch
          %299 = sbr.rel (%p297) target = $region40
        $region39: #{tpu_custom_call.1} parent=35 // pred_region
          %300 = dma.done %s293, 128
        $region40: #{tpu_custom_call.1} parent=35 // pred_fallthru
          _
        // Predicated region
        $region41: #{tpu_custom_call.1} parent=35 // pred_check
          %p301 = pneg %p85
        $region42: #{tpu_custom_call.1} parent=35 // pred_check_branch
          %303 = sbr.rel (%p301) target = $region44
        $region43: #{tpu_custom_call.1} parent=35 // pred_region
          %304 = dma.done [#allocation6], 16
        $region44: #{tpu_custom_call.1} parent=35 // pred_fallthru
          _
        // Predicated region
        $region45: #{tpu_custom_call.1} parent=35 // pred_check
          %p305 = pneg %p106
        $region46: #{tpu_custom_call.1} parent=35 // pred_check_branch
          %307 = sbr.rel (%p305) target = $region48
        $region47: #{tpu_custom_call.1} parent=35 // pred_region
          %308 = dma.done [#allocation6], 16
        $region48: #{tpu_custom_call.1} parent=35 // pred_fallthru
          _
        // Predicated region
        $region49: #{tpu_custom_call.1} parent=35 // pred_check
          %p309 = pneg %p127
        $region50: #{tpu_custom_call.1} parent=35 // pred_check_branch
          %311 = sbr.rel (%p309) target = $region52
        $region51: #{tpu_custom_call.1} parent=35 // pred_region
          %312 = dma.done [#allocation9], 256
        $region52: #{tpu_custom_call.1} parent=35 // pred_fallthru
          _
        %s313 = sand.u32 %s51, 1
        %s314 = scalar_lea.sflag [#allocation3], %s313
        %s315 = sand.u32 %s51, 1
        %s316 = smul.addr %s315, 8
        %s317 = scalar_lea.vmem [#allocation2], %s316
        %p318 = pneg %p64
        %p319 = pneg %p61
        %p320 = pneg %p85
        %p321 = pneg %p82
        %p322 = pneg %p106
        %p323 = pneg %p103
        %p324 = pneg %p127
        %p325 = pneg %p124
        %p326 = pneg %p155
        %p327 = pneg %p152
        %s328 = sand.u32 %s142, 1
        %s329 = scalar_lea.sflag [#allocation4], %s328
        %s330 = sand.u32 %s142, 1
        %s331 = smul.addr %s330, 16
        %s332 = scalar_lea.vmem [#allocation10], %s331
        %p333 = pneg %p183
        %p334 = pneg %p180
        %s335 = sand.u32 %s29, 1
        %s336 = scalar_lea.sflag [#allocation12], %s335
        %s337 = sand.u32 %s170, 1
        %s338 = smul.addr %s337, 16
        %s339 = scalar_lea.vmem [#allocation11], %s338
        %p340 = pneg %p211
        %p341 = pneg %p208
        %s342 = sand.u32 %s29, 1
        %s343 = scalar_lea.sflag [#allocation12], %s342
        %s344 = sand.u32 %s198, 1
        %s345 = smul.addr %s344, 16
        %s346 = scalar_lea.vmem [#allocation13], %s345
        %v348 = vld [vmem:[%s296] sm:$0xff]
        %v349 = vld [vmem:[#allocation5] sm:$0x1]
        %v350 = vld [vmem:[#allocation7] sm:$0x1]
        %vm351 = vcmask 261120
        %v352 = vsel %vm351, %v348, 0.0
        %353 = vadd.xlane.f32.xlu0 %v352
        %v354 = vpop.xlane.xlu0 %353
        %v355 = vrcp.pop 32.0
        %v356 = vmul.f32 %v354, %v355
        %v357 = vsub.f32 %v348, %v356
        %v358 = vmul.f32 %v357, %v357
        %v359 = vsel %vm351, %v358, 0.0
        %360 = vadd.xlane.f32.xlu0 %v359
        %v361 = vpop.xlane.xlu0 %360
        %v362 = vmul.f32 %v361, %v355
        %v363 = vadd.f32 %v362, 1e-05
        %v364 = vrsqrt.pop %v363
        %v365 = vmul.f32 %v357, %v364
        %v367 = vlaneseq
        %v368 = vshrl.u32 %v367, 7
        %v369 = vsub.s32 0, %v368
        %v370 = vrot.slane %v349, %v369
        %v372 = vmul.f32 %v365, %v370
        %v374 = vlaneseq
        %v375 = vshrl.u32 %v374, 7
        %v376 = vsub.s32 0, %v375
        %v377 = vrot.slane %v350, %v376
        %v379 = vadd.f32 %v372, %v377
        %v380 = vpack.c.bf16 %v379, %v379
        %v381 = vld [vmem:[#allocation8] sm:$0xf]
        %v382 = vld [vmem:[#allocation8 + $0x4] sm:$0xf]
        %v383 = vld [vmem:[#allocation8 + $0x8] sm:$0xf]
        %v384 = vld [vmem:[#allocation8 + $0xc] sm:$0xf]
        %v389 = vunpack.c.l.b16 %v381
        %v390 = vunpack.c.l.b16 %v382
        %v391 = vunpack.c.l.b16 %v383
        %v392 = vunpack.c.l.b16 %v384
        %v393 = vpack.c.b16 %v390, %v389
        %v394 = vpack.c.b16 %v392, %v391
        %v398 = vsel %vm351, %v380, 0
        %400 = vmatprep.subr.bf16.mxu0 0
        %401 = vmatpush1.bf16.msra.mxu0 %v393
        %402 = vmatprep.subr.bf16.mxu0 0
        %403 = vmatpush1.bf16.msra.mxu0 %v394
        %404 = vmatprep.subr.bf16.mxu0 0
        %405 = vmatpush1.bf16.msra.mxu0 0
        %406 = vmatprep.subr.bf16.mxu0 0
        %407 = vmatpush1.bf16.msra.mxu0 0
        %408 = vmatprep.subr.bf16.mxu0 0
        %409 = vmatpush1.bf16.msra.mxu0 0
        %410 = vmatprep.subr.bf16.mxu0 0
        %411 = vmatpush1.bf16.msra.mxu0 0
        %412 = vmatprep.subr.bf16.mxu0 0
        %413 = vmatpush1.bf16.msra.mxu0 0
        %414 = vmatprep.subr.bf16.mxu0 0
        %415 = vmatpush1.bf16.msra.mxu0 0
        %416 = vmatprep.subr.bf16.mxu0 0
        %417 = vmatpush1.bf16.msra.mxu0 0
        %418 = vmatprep.subr.bf16.mxu0 0
        %419 = vmatpush1.bf16.msra.mxu0 0
        %420 = vmatprep.subr.bf16.mxu0 0
        %421 = vmatpush1.bf16.msra.mxu0 0
        %422 = vmatprep.subr.bf16.mxu0 0
        %423 = vmatpush1.bf16.msra.mxu0 0
        %424 = vmatprep.subr.bf16.mxu0 0
        %425 = vmatpush1.bf16.msra.mxu0 0
        %426 = vmatprep.subr.bf16.mxu0 0
        %427 = vmatpush1.bf16.msra.mxu0 0
        %428 = vmatprep.subr.bf16.mxu0 0
        %429 = vmatpush1.bf16.msra.mxu0 0
        %430 = vmatprep.subr.bf16.mxu0 0
        %431 = vmatpush1.bf16.msra.mxu0 0
        %432 = vmatprep.mubr.bf16.mxu0 0
        %433 = vmatmul.mubr.bf16.gmra.mrb[0].mxu0 %v398
        %v434 = vpop.f32.mrb[0].mxu0
        %v435 = vadd.f32 0.0, %v434
        %v436 = vpop.f32.mrb[0].mxu0
        %v437 = vpop.f32.mrb[0].mxu0
        %v438 = vpop.f32.mrb[0].mxu0
        %439 = vdwg.mxu0
        %v440 = vpack.c.bf16 %v435, %v435
        %442 = vrot.lane.b32.xlu0 %v440, 120
        %v443 = vpop.permute.xlu0 %442
        %444 = vrot.lane.b32.xlu0 %v440, 112
        %v445 = vpop.permute.xlu0 %444
        %446 = vrot.lane.b32.xlu0 %v440, 104
        %v447 = vpop.permute.xlu0 %446
        %v449 = vunpack.c.l.s4 1983009808
        %v450 = vunpack.c.0.s8 %v449
        %v451 = vlaneseq
        %v452 = vshrl.u32 %v451, 7
        %v453 = vsub.s32 %v450, %v452
        %v454 = vrot.slane %v440, %v453
        %v457 = vunpack.c.l.s4 1983009808
        %v458 = vunpack.c.0.s8 %v457
        %v459 = vlaneseq
        %v460 = vshrl.u32 %v459, 7
        %v461 = vsub.s32 %v458, %v460
        %v462 = vrot.slane %v445, %v461
        %v463 = vcombine.low %v454, %v462
        %v464 = vcombine.high %v454, %v462
        %v466 = vunpack.c.l.s4 1934713408
        %v467 = vunpack.c.0.s8 %v466
        %v468 = vlaneseq
        %v469 = vshrl.u32 %v468, 7
        %v470 = vsub.s32 %v467, %v469
        %v471 = vrot.slane %v463, %v470
        %v473 = vunpack.c.l.s4 1934713408
        %v474 = vunpack.c.0.s8 %v473
        %v475 = vlaneseq
        %v476 = vshrl.u32 %v475, 7
        %v477 = vsub.s32 %v474, %v476
        %v478 = vrot.slane %v464, %v477
        %v479 = vcombine.high %v471, 0
        %v480 = vcombine.high %v478, 0
        %v483 = vunpack.c.l.s4 1983009808
        %v484 = vunpack.c.0.s8 %v483
        %v485 = vlaneseq
        %v486 = vshrl.u32 %v485, 7
        %v487 = vsub.s32 %v484, %v486
        %v488 = vrot.slane %v443, %v487
        %v491 = vunpack.c.l.s4 1983009808
        %v492 = vunpack.c.0.s8 %v491
        %v493 = vlaneseq
        %v494 = vshrl.u32 %v493, 7
        %v495 = vsub.s32 %v492, %v494
        %v496 = vrot.slane %v447, %v495
        %v497 = vcombine.low %v488, %v496
        %v498 = vcombine.high %v488, %v496
        %v500 = vunpack.c.l.s4 1934713408
        %v501 = vunpack.c.0.s8 %v500
        %v502 = vlaneseq
        %v503 = vshrl.u32 %v502, 7
        %v504 = vsub.s32 %v501, %v503
        %v505 = vrot.slane %v497, %v504
        %v507 = vunpack.c.l.s4 1934713408
        %v508 = vunpack.c.0.s8 %v507
        %v509 = vlaneseq
        %v510 = vshrl.u32 %v509, 7
        %v511 = vsub.s32 %v508, %v510
        %v512 = vrot.slane %v498, %v511
        %v513 = vcombine.high %v505, 0
        %v514 = vcombine.high %v512, 0
        %v517 = vpack.i.b16 %v505, %v471
        %v519 = vshrl.u32 %v471, 16
        %v520 = vshrl.u32 %v505, 16
        %v521 = vpack.i.b16 %v520, %v519
        %v525 = vpack.i.b16 %v513, %v479
        %v527 = vshrl.u32 %v479, 16
        %v528 = vshrl.u32 %v513, 16
        %v529 = vpack.i.b16 %v528, %v527
        %v533 = vpack.i.b16 %v512, %v478
        %v535 = vshrl.u32 %v478, 16
        %v536 = vshrl.u32 %v512, 16
        %v537 = vpack.i.b16 %v536, %v535
        %v541 = vpack.i.b16 %v514, %v480
        %v543 = vshrl.u32 %v480, 16
        %v544 = vshrl.u32 %v514, 16
        %v545 = vpack.i.b16 %v544, %v543
        %v547 = vcombine.low %v517, %v533
        %v549 = vunpack.c.l.s4 1983009808
        %v550 = vunpack.c.0.s8 %v549
        %v551 = vlaneseq
        %v552 = vshrl.u32 %v551, 7
        %v553 = vsub.s32 %v550, %v552
        %v554 = vrot.slane %v547, %v553
        %v555 = vcombine.low %v525, %v541
        %v557 = vunpack.c.l.s4 1983009808
        %v558 = vunpack.c.0.s8 %v557
        %v559 = vlaneseq
        %v560 = vshrl.u32 %v559, 7
        %v561 = vsub.s32 %v558, %v560
        %v562 = vrot.slane %v555, %v561
        %v563 = vcombine.low %v554, %v562
        %v565 = vunpack.c.l.s4 1934713408
        %v566 = vunpack.c.0.s8 %v565
        %v567 = vlaneseq
        %v568 = vshrl.u32 %v567, 7
        %v569 = vsub.s32 %v566, %v568
        %v570 = vrot.slane %v563, %v569
        %v571 = vcombine.high %v570, 0
        %v572 = vcombine.low %v521, %v537
        %v574 = vunpack.c.l.s4 1983009808
        %v575 = vunpack.c.0.s8 %v574
        %v576 = vlaneseq
        %v577 = vshrl.u32 %v576, 7
        %v578 = vsub.s32 %v575, %v577
        %v579 = vrot.slane %v572, %v578
        %v580 = vcombine.low %v529, %v545
        %v582 = vunpack.c.l.s4 1983009808
        %v583 = vunpack.c.0.s8 %v582
        %v584 = vlaneseq
        %v585 = vshrl.u32 %v584, 7
        %v586 = vsub.s32 %v583, %v585
        %v587 = vrot.slane %v580, %v586
        %v588 = vcombine.low %v579, %v587
        %v590 = vunpack.c.l.s4 1934713408
        %v591 = vunpack.c.0.s8 %v590
        %v592 = vlaneseq
        %v593 = vshrl.u32 %v592, 7
        %v594 = vsub.s32 %v591, %v593
        %v595 = vrot.slane %v588, %v594
        %v596 = vcombine.high %v595, 0
        %v599 = vpack.i.b16 %v595, %v570
        %v601 = vshrl.u32 %v570, 16
        %v602 = vshrl.u32 %v595, 16
        %v603 = vpack.i.b16 %v602, %v601
        %v607 = vpack.i.b16 %v596, %v571
        %v609 = vshrl.u32 %v571, 16
        %v610 = vshrl.u32 %v596, 16
        %v611 = vpack.i.b16 %v610, %v609
        %vm613 = vcmask 60416
        %614 = vst.msk [vmem:[%s332] sm:$0xf] %vm613, %v599
        %615 = vst.msk [vmem:[%s332 + $0x4] sm:$0xf] %vm613, %v603
        %616 = vst.msk [vmem:[%s332 + $0x8] sm:$0xf] %vm613, %v607
        %617 = vst.msk [vmem:[%s332 + $0xc] sm:$0xf] %vm613, %v611
        %618 = vrot.lane.b32.xlu0 %v440, 96
        %v619 = vpop.permute.xlu0 %618
        %620 = vrot.lane.b32.xlu0 %v443, 96
        %v621 = vpop.permute.xlu0 %620
        %622 = vrot.lane.b32.xlu0 %v445, 96
        %v623 = vpop.permute.xlu0 %622
        %624 = vrot.lane.b32.xlu0 %v447, 96
        %v625 = vpop.permute.xlu0 %624
        %v628 = vunpack.c.l.s4 1983009808
        %v629 = vunpack.c.0.s8 %v628
        %v630 = vlaneseq
        %v631 = vshrl.u32 %v630, 7
        %v632 = vsub.s32 %v629, %v631
        %v633 = vrot.slane %v619, %v632
        %v636 = vunpack.c.l.s4 1983009808
        %v637 = vunpack.c.0.s8 %v636
        %v638 = vlaneseq
        %v639 = vshrl.u32 %v638, 7
        %v640 = vsub.s32 %v637, %v639
        %v641 = vrot.slane %v623, %v640
        %v642 = vcombine.low %v633, %v641
        %v643 = vcombine.high %v633, %v641
        %v645 = vunpack.c.l.s4 1934713408
        %v646 = vunpack.c.0.s8 %v645
        %v647 = vlaneseq
        %v648 = vshrl.u32 %v647, 7
        %v649 = vsub.s32 %v646, %v648
        %v650 = vrot.slane %v642, %v649
        %v652 = vunpack.c.l.s4 1934713408
        %v653 = vunpack.c.0.s8 %v652
        %v654 = vlaneseq
        %v655 = vshrl.u32 %v654, 7
        %v656 = vsub.s32 %v653, %v655
        %v657 = vrot.slane %v643, %v656
        %v658 = vcombine.high %v650, 0
        %v659 = vcombine.high %v657, 0
        %v662 = vunpack.c.l.s4 1983009808
        %v663 = vunpack.c.0.s8 %v662
        %v664 = vlaneseq
        %v665 = vshrl.u32 %v664, 7
        %v666 = vsub.s32 %v663, %v665
        %v667 = vrot.slane %v621, %v666
        %v670 = vunpack.c.l.s4 1983009808
        %v671 = vunpack.c.0.s8 %v670
        %v672 = vlaneseq
        %v673 = vshrl.u32 %v672, 7
        %v674 = vsub.s32 %v671, %v673
        %v675 = vrot.slane %v625, %v674
        %v676 = vcombine.low %v667, %v675
        %v677 = vcombine.high %v667, %v675
        %v679 = vunpack.c.l.s4 1934713408
        %v680 = vunpack.c.0.s8 %v679
        %v681 = vlaneseq
        %v682 = vshrl.u32 %v681, 7
        %v683 = vsub.s32 %v680, %v682
        %v684 = vrot.slane %v676, %v683
        %v686 = vunpack.c.l.s4 1934713408
        %v687 = vunpack.c.0.s8 %v686
        %v688 = vlaneseq
        %v689 = vshrl.u32 %v688, 7
        %v690 = vsub.s32 %v687, %v689
        %v691 = vrot.slane %v677, %v690
        %v692 = vcombine.high %v684, 0
        %v693 = vcombine.high %v691, 0
        %v696 = vpack.i.b16 %v684, %v650
        %v698 = vshrl.u32 %v650, 16
        %v699 = vshrl.u32 %v684, 16
        %v700 = vpack.i.b16 %v699, %v698
        %v704 = vpack.i.b16 %v692, %v658
        %v706 = vshrl.u32 %v658, 16
        %v707 = vshrl.u32 %v692, 16
        %v708 = vpack.i.b16 %v707, %v706
        %v712 = vpack.i.b16 %v691, %v657
        %v714 = vshrl.u32 %v657, 16
        %v715 = vshrl.u32 %v691, 16
        %v716 = vpack.i.b16 %v715, %v714
        %v720 = vpack.i.b16 %v693, %v659
        %v722 = vshrl.u32 %v659, 16
        %v723 = vshrl.u32 %v693, 16
        %v724 = vpack.i.b16 %v723, %v722
        %v726 = vcombine.low %v696, %v712
        %v728 = vunpack.c.l.s4 1983009808
        %v729 = vunpack.c.0.s8 %v728
        %v730 = vlaneseq
        %v731 = vshrl.u32 %v730, 7
        %v732 = vsub.s32 %v729, %v731
        %v733 = vrot.slane %v726, %v732
        %v734 = vcombine.low %v704, %v720
        %v736 = vunpack.c.l.s4 1983009808
        %v737 = vunpack.c.0.s8 %v736
        %v738 = vlaneseq
        %v739 = vshrl.u32 %v738, 7
        %v740 = vsub.s32 %v737, %v739
        %v741 = vrot.slane %v734, %v740
        %v742 = vcombine.low %v733, %v741
        %v744 = vunpack.c.l.s4 1934713408
        %v745 = vunpack.c.0.s8 %v744
        %v746 = vlaneseq
        %v747 = vshrl.u32 %v746, 7
        %v748 = vsub.s32 %v745, %v747
        %v749 = vrot.slane %v742, %v748
        %v750 = vcombine.high %v749, 0
        %v751 = vcombine.low %v700, %v716
        %v753 = vunpack.c.l.s4 1983009808
        %v754 = vunpack.c.0.s8 %v753
        %v755 = vlaneseq
        %v756 = vshrl.u32 %v755, 7
        %v757 = vsub.s32 %v754, %v756
        %v758 = vrot.slane %v751, %v757
        %v759 = vcombine.low %v708, %v724
        %v761 = vunpack.c.l.s4 1983009808
        %v762 = vunpack.c.0.s8 %v761
        %v763 = vlaneseq
        %v764 = vshrl.u32 %v763, 7
        %v765 = vsub.s32 %v762, %v764
        %v766 = vrot.slane %v759, %v765
        %v767 = vcombine.low %v758, %v766
        %v769 = vunpack.c.l.s4 1934713408
        %v770 = vunpack.c.0.s8 %v769
        %v771 = vlaneseq
        %v772 = vshrl.u32 %v771, 7
        %v773 = vsub.s32 %v770, %v772
        %v774 = vrot.slane %v767, %v773
        %v775 = vcombine.high %v774, 0
        %v778 = vpack.i.b16 %v774, %v749
        %v780 = vshrl.u32 %v749, 16
        %v781 = vshrl.u32 %v774, 16
        %v782 = vpack.i.b16 %v781, %v780
        %v786 = vpack.i.b16 %v775, %v750
        %v788 = vshrl.u32 %v750, 16
        %v789 = vshrl.u32 %v775, 16
        %v790 = vpack.i.b16 %v789, %v788
        %792 = vst.msk [vmem:[%s339] sm:$0xf] %vm613, %v778
        %793 = vst.msk [vmem:[%s339 + $0x4] sm:$0xf] %vm613, %v782
        %794 = vst.msk [vmem:[%s339 + $0x8] sm:$0xf] %vm613, %v786
        %795 = vst.msk [vmem:[%s339 + $0xc] sm:$0xf] %vm613, %v790
        %796 = vrot.lane.b32.xlu0 %v440, 64
        %v797 = vpop.permute.xlu0 %796
        %798 = vrot.lane.b32.xlu0 %v443, 64
        %v799 = vpop.permute.xlu0 %798
        %800 = vrot.lane.b32.xlu0 %v445, 64
        %v801 = vpop.permute.xlu0 %800
        %802 = vrot.lane.b32.xlu0 %v447, 64
        %v803 = vpop.permute.xlu0 %802
        %v806 = vunpack.c.l.s4 1983009808
        %v807 = vunpack.c.0.s8 %v806
        %v808 = vlaneseq
        %v809 = vshrl.u32 %v808, 7
        %v810 = vsub.s32 %v807, %v809
        %v811 = vrot.slane %v797, %v810
        %v814 = vunpack.c.l.s4 1983009808
        %v815 = vunpack.c.0.s8 %v814
        %v816 = vlaneseq
        %v817 = vshrl.u32 %v816, 7
        %v818 = vsub.s32 %v815, %v817
        %v819 = vrot.slane %v801, %v818
        %v820 = vcombine.low %v811, %v819
        %v821 = vcombine.high %v811, %v819
        %v823 = vunpack.c.l.s4 1934713408
        %v824 = vunpack.c.0.s8 %v823
        %v825 = vlaneseq
        %v826 = vshrl.u32 %v825, 7
        %v827 = vsub.s32 %v824, %v826
        %v828 = vrot.slane %v820, %v827
        %v830 = vunpack.c.l.s4 1934713408
        %v831 = vunpack.c.0.s8 %v830
        %v832 = vlaneseq
        %v833 = vshrl.u32 %v832, 7
        %v834 = vsub.s32 %v831, %v833
        %v835 = vrot.slane %v821, %v834
        %v836 = vcombine.high %v828, 0
        %v837 = vcombine.high %v835, 0
        %v840 = vunpack.c.l.s4 1983009808
        %v841 = vunpack.c.0.s8 %v840
        %v842 = vlaneseq
        %v843 = vshrl.u32 %v842, 7
        %v844 = vsub.s32 %v841, %v843
        %v845 = vrot.slane %v799, %v844
        %v848 = vunpack.c.l.s4 1983009808
        %v849 = vunpack.c.0.s8 %v848
        %v850 = vlaneseq
        %v851 = vshrl.u32 %v850, 7
        %v852 = vsub.s32 %v849, %v851
        %v853 = vrot.slane %v803, %v852
        %v854 = vcombine.low %v845, %v853
        %v855 = vcombine.high %v845, %v853
        %v857 = vunpack.c.l.s4 1934713408
        %v858 = vunpack.c.0.s8 %v857
        %v859 = vlaneseq
        %v860 = vshrl.u32 %v859, 7
        %v861 = vsub.s32 %v858, %v860
        %v862 = vrot.slane %v854, %v861
        %v864 = vunpack.c.l.s4 1934713408
        %v865 = vunpack.c.0.s8 %v864
        %v866 = vlaneseq
        %v867 = vshrl.u32 %v866, 7
        %v868 = vsub.s32 %v865, %v867
        %v869 = vrot.slane %v855, %v868
        %v870 = vcombine.high %v862, 0
        %v871 = vcombine.high %v869, 0
        %v874 = vpack.i.b16 %v862, %v828
        %v876 = vshrl.u32 %v828, 16
        %v877 = vshrl.u32 %v862, 16
        %v878 = vpack.i.b16 %v877, %v876
        %v882 = vpack.i.b16 %v870, %v836
        %v884 = vshrl.u32 %v836, 16
        %v885 = vshrl.u32 %v870, 16
        %v886 = vpack.i.b16 %v885, %v884
        %v890 = vpack.i.b16 %v869, %v835
        %v892 = vshrl.u32 %v835, 16
        %v893 = vshrl.u32 %v869, 16
        %v894 = vpack.i.b16 %v893, %v892
        %v898 = vpack.i.b16 %v871, %v837
        %v900 = vshrl.u32 %v837, 16
        %v901 = vshrl.u32 %v871, 16
        %v902 = vpack.i.b16 %v901, %v900
        %v904 = vcombine.low %v874, %v890
        %v906 = vunpack.c.l.s4 1983009808
        %v907 = vunpack.c.0.s8 %v906
        %v908 = vlaneseq
        %v909 = vshrl.u32 %v908, 7
        %v910 = vsub.s32 %v907, %v909
        %v911 = vrot.slane %v904, %v910
        %v912 = vcombine.low %v882, %v898
        %v914 = vunpack.c.l.s4 1983009808
        %v915 = vunpack.c.0.s8 %v914
        %v916 = vlaneseq
        %v917 = vshrl.u32 %v916, 7
        %v918 = vsub.s32 %v915, %v917
        %v919 = vrot.slane %v912, %v918
        %v920 = vcombine.low %v911, %v919
        %v922 = vunpack.c.l.s4 1934713408
        %v923 = vunpack.c.0.s8 %v922
        %v924 = vlaneseq
        %v925 = vshrl.u32 %v924, 7
        %v926 = vsub.s32 %v923, %v925
        %v927 = vrot.slane %v920, %v926
        %v928 = vcombine.high %v927, 0
        %v929 = vcombine.low %v878, %v894
        %v931 = vunpack.c.l.s4 1983009808
        %v932 = vunpack.c.0.s8 %v931
        %v933 = vlaneseq
        %v934 = vshrl.u32 %v933, 7
        %v935 = vsub.s32 %v932, %v934
        %v936 = vrot.slane %v929, %v935
        %v937 = vcombine.low %v886, %v902
        %v939 = vunpack.c.l.s4 1983009808
        %v940 = vunpack.c.0.s8 %v939
        %v941 = vlaneseq
        %v942 = vshrl.u32 %v941, 7
        %v943 = vsub.s32 %v940, %v942
        %v944 = vrot.slane %v937, %v943
        %v945 = vcombine.low %v936, %v944
        %v947 = vunpack.c.l.s4 1934713408
        %v948 = vunpack.c.0.s8 %v947
        %v949 = vlaneseq
        %v950 = vshrl.u32 %v949, 7
        %v951 = vsub.s32 %v948, %v950
        %v952 = vrot.slane %v945, %v951
        %v953 = vcombine.high %v952, 0
        %v956 = vpack.i.b16 %v952, %v927
        %v958 = vshrl.u32 %v927, 16
        %v959 = vshrl.u32 %v952, 16
        %v960 = vpack.i.b16 %v959, %v958
        %v964 = vpack.i.b16 %v953, %v928
        %v966 = vshrl.u32 %v928, 16
        %v967 = vshrl.u32 %v953, 16
        %v968 = vpack.i.b16 %v967, %v966
        %970 = vst.msk [vmem:[%s346] sm:$0xf] %vm613, %v956
        %971 = vst.msk [vmem:[%s346 + $0x4] sm:$0xf] %vm613, %v960
        %972 = vst.msk [vmem:[%s346 + $0x8] sm:$0xf] %vm613, %v964
        %973 = vst.msk [vmem:[%s346 + $0xc] sm:$0xf] %vm613, %v968
        %s974 = sand.u32 %s142, 1
        %s975 = scalar_lea.sflag [#allocation4], %s974
        %s976 = sand.u32 %s142, 1
        %s977 = smul.addr %s976, 16
        %s978 = scalar_lea.vmem [#allocation10], %s977
        %s979 = sand.u32 %s29, 1
        %s980 = scalar_lea.sflag [#allocation12], %s979
        %s981 = sand.u32 %s170, 1
        %s982 = smul.addr %s981, 16
        %s983 = scalar_lea.vmem [#allocation11], %s982
        %s984 = sand.u32 %s29, 1
        %s985 = scalar_lea.sflag [#allocation12], %s984
        %s986 = sand.u32 %s198, 1
        %s987 = smul.addr %s986, 16
        %s988 = scalar_lea.vmem [#allocation13], %s987
        // Predicated region
        $region53: #{tpu_custom_call.1} parent=35 // pred_check
          %p989 = pneg %p152
        $region54: #{tpu_custom_call.1} parent=35 // pred_check_branch
          %991 = sbr.rel (%p989) target = $region56
        $region55: #{tpu_custom_call.1} parent=35 // pred_region
          %s993 = ssub.s32 256, 256
          %994 = vsyncadd %s975, %s993
          %s995 = smul.addr %s33, 8
          %s996 = sadd.s32 %s34, %s995
          %s997 = smul.addr %s996, 64
          %s998 = scalar_lea.hbm %s4, %s997
          %s999 = sshll.u32 %s978, 4
          %s1000 = int_to_ptr.vmem [resolvable:$true] %s999
          %1005 = dma.vmem_to_hbm [thread:$0]  %s1000, 256, %s998, %s975, 64, 128, 4
        $region56: #{tpu_custom_call.1} parent=35 // pred_fallthru
          _
        // Predicated region
        $region57: #{tpu_custom_call.1} parent=35 // pred_check
          %p1006 = pneg %p180
        $region58: #{tpu_custom_call.1} parent=35 // pred_check_branch
          %1008 = sbr.rel (%p1006) target = $region60
        $region59: #{tpu_custom_call.1} parent=35 // pred_region
          %s1010 = ssub.s32 256, 256
          %1011 = vsyncadd %s980, %s1010
          %s1012 = smul.addr %s33, 8
          %s1013 = sadd.s32 %s34, %s1012
          %s1014 = smul.addr %s1013, 64
          %s1015 = scalar_lea.hbm %s5, %s1014
          %s1016 = sshll.u32 %s983, 4
          %s1017 = int_to_ptr.vmem [resolvable:$true] %s1016
          %1022 = dma.vmem_to_hbm [thread:$0]  %s1017, 256, %s1015, %s980, 64, 128, 4
        $region60: #{tpu_custom_call.1} parent=35 // pred_fallthru
          _
        // Predicated region
        $region61: #{tpu_custom_call.1} parent=35 // pred_check
          %p1023 = pneg %p208
        $region62: #{tpu_custom_call.1} parent=35 // pred_check_branch
          %1025 = sbr.rel (%p1023) target = $region64
        $region63: #{tpu_custom_call.1} parent=35 // pred_region
          %s1027 = ssub.s32 256, 256
          %1028 = vsyncadd %s985, %s1027
          %s1029 = smul.addr %s33, 8
          %s1030 = sadd.s32 %s34, %s1029
          %s1031 = smul.addr %s1030, 64
          %s1032 = scalar_lea.hbm %s6, %s1031
          %s1033 = sshll.u32 %s988, 4
          %s1034 = int_to_ptr.vmem [resolvable:$true] %s1033
          %1039 = dma.vmem_to_hbm [thread:$0]  %s1034, 256, %s1032, %s985, 64, 128, 4
        $region64: #{tpu_custom_call.1} parent=35 // pred_fallthru
          _
      $region36: #{tpu_custom_call.1} parent=5 // pred_fallthru
        _
      %p1040 = scmp.le.s32.totalorder 2, %s24
      // Predicated region
      $region65: #{tpu_custom_call.1} parent=5 // pred_check
        %p1041 = pneg %p1040
      $region66: #{tpu_custom_call.1} parent=5 // pred_check_branch
        %1043 = sbr.rel (%p1041) target = $region68
      $region67: #{tpu_custom_call.1} parent=5 // pred_region
        %s1044 = ssub.s32 %s24, 2
        // Predicated region
        $region69: #{tpu_custom_call.1} parent=67 // pred_check
          %p1045 = pneg %p158
        $region70: #{tpu_custom_call.1} parent=67 // pred_check_branch
          %1047 = sbr.rel (%p1045) target = $region72
        $region71: #{tpu_custom_call.1} parent=67 // pred_region
          %s1048 = sand.u32 %s143, 1
          %s1049 = scalar_lea.sflag [#allocation4], %s1048
          %s1050 = sand.u32 %s143, 1
          %s1051 = smul.addr %s1050, 16
          %s1052 = scalar_lea.vmem [#allocation10], %s1051
          %1053 = dma.done %s1049, 256
        $region72: #{tpu_custom_call.1} parent=67 // pred_fallthru
          _
        // Predicated region
        $region73: #{tpu_custom_call.1} parent=67 // pred_check
          %p1054 = pneg %p186
        $region74: #{tpu_custom_call.1} parent=67 // pred_check_branch
          %1056 = sbr.rel (%p1054) target = $region76
        $region75: #{tpu_custom_call.1} parent=67 // pred_region
          %s1057 = sand.u32 %s30, 1
          %s1058 = scalar_lea.sflag [#allocation12], %s1057
          %s1059 = sand.u32 %s171, 1
          %s1060 = smul.addr %s1059, 16
          %s1061 = scalar_lea.vmem [#allocation11], %s1060
          %1062 = dma.done %s1058, 256
        $region76: #{tpu_custom_call.1} parent=67 // pred_fallthru
          _
        // Predicated region
        $region77: #{tpu_custom_call.1} parent=67 // pred_check
          %p1063 = pneg %p214
        $region78: #{tpu_custom_call.1} parent=67 // pred_check_branch
          %1065 = sbr.rel (%p1063) target = $region80
        $region79: #{tpu_custom_call.1} parent=67 // pred_region
          %s1066 = sand.u32 %s30, 1
          %s1067 = scalar_lea.sflag [#allocation12], %s1066
          %s1068 = sand.u32 %s199, 1
          %s1069 = smul.addr %s1068, 16
          %s1070 = scalar_lea.vmem [#allocation13], %s1069
          %1071 = dma.done %s1067, 256
        $region80: #{tpu_custom_call.1} parent=67 // pred_fallthru
          _
      $region68: #{tpu_custom_call.1} parent=5 // pred_fallthru
        _
    $region6: #{tpu_custom_call.1} parent=1 // loop_footer
      %s28 = sadd.s32 1, %s24
    $region7: #{tpu_custom_call.1} parent=1 // loop_footer_branch
      %23 = sbr.rel target = $region3
    $region8: #{tpu_custom_call.1} parent=1 // loop_exit
      _
    %1072 = vsyncpa [#allocation3], 1
    %s1073 = scalar_lea.sflag [#allocation3], 1
    %1074 = vsyncpa %s1073, 1
    %1075 = vsyncpa [#allocation6], 1
    %1076 = vsyncpa [#allocation9], 1
    %1077 = vsyncpa [#allocation4], 1
    %s1078 = scalar_lea.sflag [#allocation4], 1
    %1079 = vsyncpa %s1078, 1
    %1080 = vsyncpa [#allocation12], 1
    %s1081 = scalar_lea.sflag [#allocation12], 1
    %1082 = vsyncpa %s1081, 1

</llo_original>
